<compile_context>
chip_gen: v5e
topology: v5e:2x2
jax: 0.10.0
libtpu: 0.0.40
codegen_flags: <defaults>
</compile_context>

<pallas_src>
import jax
import jax.numpy as jnp
from jax import lax
from jax.experimental import pallas as pl
from jax.experimental.pallas import tpu as pltpu

# ----------------------- configuration (small, consistent with the module) ---
N_NUM = 8                      # n_num_features (no num_embeddings -> pass-through)
CAT_CARDS = [3, 5]             # cat_cardinalities -> OneHotEncoding0d
D_CAT = sum(CAT_CARDS)
D_FLAT = N_NUM + D_CAT         # 16
D_BLOCK = 64                   # backbone['d_block']
N_BLOCKS = 2                   # backbone['n_blocks'] (unrolled explicitly below)
K = 4                          # ensemble size k
N_CLASSES = None               # regression -> d_out = 1 -> final squeeze(-1)
D_OUT = 1
B = 16                         # batch
KD = K * D_BLOCK               # 256 — ensemble folded into the lane (N) dimension


# ----------------------------- Pallas kernel --------------------------------
def tabm_kernel(xnum_ref, xcat_ref,
                w0_ref, b0_ref,
                w1_ref, b1_ref,
                wsel_ref, bout_ref,
                out_ref):
    # ---- fused feature build: [x_num | one_hot(cat0) | one_hot(cat1)] -> (B, D_FLAT) ----
    lane = lax.broadcasted_iota(jnp.int32, (B, D_FLAT), 1)
    cat = xcat_ref[...]                                    # (B, 2) int32
    c0 = cat[:, 0:1]
    c1 = cat[:, 1:2]
    in_c0 = (lane >= N_NUM) & (lane < N_NUM + CAT_CARDS[0])
    in_c1 = lane >= N_NUM + CAT_CARDS[0]
    onehot = (in_c0 & (c0 == lane - N_NUM)) | \
             (in_c1 & (c1 == lane - (N_NUM + CAT_CARDS[0])))
    x = xnum_ref[...] + onehot.astype(jnp.float32)         # numeric lanes are zero-padded

    # ---- MLP block 0: ensemble (+ r0/s0 scalings) folded into N = K*D_BLOCK = 256 ----
    h = jnp.dot(x, w0_ref[...], preferred_element_type=jnp.float32)   # (B, 256)
    h = jnp.maximum(h + b0_ref[...], 0.0)

    # ---- MLP block 1: block-diagonal (256, 256) weight, lane-dense activations ----
    h = jnp.dot(h, w1_ref[...], preferred_element_type=jnp.float32)   # (B, 256)
    h = jnp.maximum(h + b1_ref[...], 0.0)

    # ---- output head delu.nn.NLinear(k, d_block, 1) as one selector matmul (256, K) ----
    out_ref[...] = (jnp.dot(h, wsel_ref[...], preferred_element_type=jnp.float32)
                    + bout_ref[...])                       # (B, K)


# --------------------------- parameter folding -------------------------------
def fold_params(p):
    """Fold per-member r/s scalings and the ensemble axis into stacked weights."""
    # Block 0: (D_FLAT, K*D_BLOCK), member k occupies columns [k*64:(k+1)*64].
    w0_all = jnp.concatenate(
        [p['r0'][k][:, None] * p['w0t'] * p['s0'][k][None, :] for k in range(K)], axis=1)
    b0_all = p['b0'].reshape(1, KD)                        # k-major lane layout

    # Block 1: block-diagonal (K*D_BLOCK, K*D_BLOCK).
    w1_all = jnp.zeros((KD, KD), jnp.float32)
    for k in range(K):
        blk = p['r1'][k][:, None] * p['w1t'] * p['s1'][k][None, :]
        w1_all = w1_all.at[k * D_BLOCK:(k + 1) * D_BLOCK,
                           k * D_BLOCK:(k + 1) * D_BLOCK].set(blk)
    b1_all = p['b1'].reshape(1, KD)

    # Head selector: (K*D_BLOCK, K), member k's wout in rows of block k, column k.
    wsel = jnp.zeros((KD, K), jnp.float32)
    for k in range(K):
        wsel = wsel.at[k * D_BLOCK:(k + 1) * D_BLOCK, k].set(p['wout'][k, :, 0])
    bout = p['bout'].reshape(1, K)

    return {'w0': w0_all, 'b0': b0_all, 'w1': w1_all, 'b1': b1_all,
            'wsel': wsel, 'bout': bout}


# ------------------------------ wrapper --------------------------------------
def tabm_forward(x_num, x_cat, fp):
    xnum_pad = jnp.concatenate(
        [x_num.astype(jnp.float32), jnp.zeros((B, D_CAT), jnp.float32)], axis=1)  # (B, D_FLAT)
    xcat = x_cat.astype(jnp.int32)                         # (B, 2)

    operands = (xnum_pad, xcat,
                fp['w0'], fp['b0'], fp['w1'], fp['b1'], fp['wsel'], fp['bout'])

    vmem = pl.BlockSpec(memory_space=pltpu.MemorySpace.VMEM)   # whole array resident in VMEM
    return pl.pallas_call(
        tabm_kernel,
        out_shape=jax.ShapeDtypeStruct((B, K), jnp.float32),
        in_specs=[vmem] * len(operands),
        out_specs=vmem,
    )(*operands)                                            # (B, K) — matches module output


# --------------------------- pure-JAX reference -------------------------------
def reference_forward(x_num, x_cat, p):
    parts = [x_num.astype(jnp.float32)]
    for i, c in enumerate(CAT_CARDS):
        parts.append(jax.nn.one_hot(x_cat[:, i], c, dtype=jnp.float32))
    x = jnp.concatenate(parts, axis=1)                      # (B, D_FLAT)
    h = jnp.broadcast_to(x[:, None, :], (B, K, D_FLAT)) * p['r0'][None]
    h = jnp.einsum('bki,io->bko', h, p['w0t'], precision='highest')
    h = jnp.maximum(h * p['s0'][None] + p['b0'][None], 0.0)
    h = h * p['r1'][None]
    h = jnp.einsum('bki,io->bko', h, p['w1t'], precision='highest')
    h = jnp.maximum(h * p['s1'][None] + p['b1'][None], 0.0)
    y = jnp.einsum('bki,kio->bko', h, p['wout'], precision='highest') + p['bout'][None]
    return y[..., 0]                                        # (B, K)


# ------------------------------- params ---------------------------------------
def make_params(key):
    ks = jax.random.split(key, 10)

    def rand_signs(k, shape):  # 'random-signs' scaling init (tabm first-layer r)
        return jnp.where(jax.random.bernoulli(k, 0.5, shape), 1.0, -1.0).astype(jnp.float32)

    # TODO(synk): PyTorch's exact section-wise / kaiming init is approximated with
    # synthetic values of the same shapes (forward semantics unchanged).
    return {
        'r0':  rand_signs(ks[0], (K, D_FLAT)),
        'w0t': (jax.random.normal(ks[1], (D_FLAT, D_BLOCK), jnp.float32)
                / jnp.sqrt(jnp.float32(D_FLAT))),
        's0':  1.0 + 0.05 * jax.random.normal(ks[2], (K, D_BLOCK), jnp.float32),
        'b0':  0.1 * jax.random.normal(ks[3], (K, D_BLOCK), jnp.float32),
        'r1':  1.0 + 0.05 * jax.random.normal(ks[4], (K, D_BLOCK), jnp.float32),
        'w1t': (jax.random.normal(ks[5], (D_BLOCK, D_BLOCK), jnp.float32)
                / jnp.sqrt(jnp.float32(D_BLOCK))),
        's1':  1.0 + 0.05 * jax.random.normal(ks[6], (K, D_BLOCK), jnp.float32),
        'b1':  0.1 * jax.random.normal(ks[7], (K, D_BLOCK), jnp.float32),
        'wout': (jax.random.normal(ks[8], (K, D_BLOCK, D_OUT), jnp.float32)
                 / jnp.sqrt(jnp.float32(D_BLOCK))),
        'bout': 0.1 * jax.random.normal(ks[9], (K, D_OUT), jnp.float32),
    }


# ------------------------------- main -----------------------------------------
if __name__ == "__main__":
    key = jax.random.PRNGKey(0)
    k_in, k_cat, k_par = jax.random.split(key, 3)

    x_num = jax.random.normal(k_in, (B, N_NUM), jnp.float32)
    cat_keys = jax.random.split(k_cat, len(CAT_CARDS))
    x_cat = jnp.stack(
        [jax.random.randint(cat_keys[i], (B,), 0, c) for i, c in enumerate(CAT_CARDS)],
        axis=1,
    )  # (B, 2) int32

    params = make_params(k_par)
    folded = jax.tree_util.tree_map(jax.block_until_ready, fold_params(params))

    out = jax.block_until_ready(tabm_forward(x_num, x_cat, folded))
    ref = reference_forward(x_num, x_cat, params)

    assert out.shape == (B, K), out.shape
    # Folding r/s into the weights reassociates a few f32 products; keep a tight but
    # reassociation-tolerant bound against the precision='highest' reference.
    assert jnp.allclose(out, ref, rtol=1e-4, atol=1e-5), (out, ref)

    print("KERNEL_OK")
</pallas_src>

<mosaic_0001>
module attributes {stable_mosaic.version = 11 : i64} {
  func.func @tabm_kernel(%arg0: memref<16x16xf32, #tpu.memory_space<vmem>>, %arg1: memref<16x2xi32, #tpu.memory_space<vmem>>, %arg2: memref<16x256xf32, #tpu.memory_space<vmem>>, %arg3: memref<1x256xf32, #tpu.memory_space<vmem>>, %arg4: memref<256x256xf32, #tpu.memory_space<vmem>>, %arg5: memref<1x256xf32, #tpu.memory_space<vmem>>, %arg6: memref<256x4xf32, #tpu.memory_space<vmem>>, %arg7: memref<1x4xf32, #tpu.memory_space<vmem>>, %arg8: memref<16x4xf32, #tpu.memory_space<vmem>>) attributes {dimension_semantics = [], scalar_prefetch = 0 : i64, scratch_operands = 0 : i64, tpu.core_type = #tpu.core_type<tc>} {
    %0 = tpu.iota {dimensions = array<i32: 1>} : vector<16x16xi32>
    %c0 = arith.constant 0 : index
    %c0_0 = arith.constant 0 : index
    %1 = vector.load %arg1[%c0, %c0_0] : memref<16x2xi32, #tpu.memory_space<vmem>>, vector<16x2xi32>
    %2 = vector.extract_strided_slice %1 {offsets = [0, 0], sizes = [16, 1], strides = [1, 1]} : vector<16x2xi32> to vector<16x1xi32>
    %3 = vector.extract_strided_slice %1 {offsets = [0, 1], sizes = [16, 1], strides = [1, 1]} : vector<16x2xi32> to vector<16x1xi32>
    %c8_i32 = arith.constant 8 : i32
    %4 = vector.broadcast %c8_i32 : i32 to vector<16x16xi32>
    %5 = arith.cmpi sge, %0, %4 : vector<16x16xi32>
    %c11_i32 = arith.constant 11 : i32
    %6 = vector.broadcast %c11_i32 : i32 to vector<16x16xi32>
    %7 = arith.cmpi slt, %0, %6 : vector<16x16xi32>
    %8 = arith.andi %5, %7 : vector<16x16xi1>
    %c11_i32_1 = arith.constant 11 : i32
    %9 = vector.broadcast %c11_i32_1 : i32 to vector<16x16xi32>
    %10 = arith.cmpi sge, %0, %9 : vector<16x16xi32>
    %c8_i32_2 = arith.constant 8 : i32
    %11 = vector.broadcast %c8_i32_2 : i32 to vector<16x16xi32>
    %12 = arith.subi %0, %11 : vector<16x16xi32>
    %13 = vector.broadcast %2 : vector<16x1xi32> to vector<16x16xi32>
    %14 = arith.cmpi eq, %13, %12 : vector<16x16xi32>
    %15 = arith.andi %8, %14 : vector<16x16xi1>
    %c11_i32_3 = arith.constant 11 : i32
    %16 = vector.broadcast %c11_i32_3 : i32 to vector<16x16xi32>
    %17 = arith.subi %0, %16 : vector<16x16xi32>
    %18 = vector.broadcast %3 : vector<16x1xi32> to vector<16x16xi32>
    %19 = arith.cmpi eq, %18, %17 : vector<16x16xi32>
    %20 = arith.andi %10, %19 : vector<16x16xi1>
    %21 = arith.ori %15, %20 : vector<16x16xi1>
    %c0_4 = arith.constant 0 : index
    %c0_5 = arith.constant 0 : index
    %22 = vector.load %arg0[%c0_4, %c0_5] : memref<16x16xf32, #tpu.memory_space<vmem>>, vector<16x16xf32>
    %23 = arith.extui %21 : vector<16x16xi1> to vector<16x16xi32>
    %24 = arith.sitofp %23 : vector<16x16xi32> to vector<16x16xf32>
    %25 = arith.addf %22, %24 : vector<16x16xf32>
    %c0_6 = arith.constant 0 : index
    %c0_7 = arith.constant 0 : index
    %26 = vector.load %arg2[%c0_6, %c0_7] : memref<16x256xf32, #tpu.memory_space<vmem>>, vector<16x256xf32>
    %cst = arith.constant dense<0.000000e+00> : vector<16x256xf32>
    %27 = tpu.matmul %25, %26, %cst {dimension_numbers = #tpu.dot_dimension_numbers<[1], [0], [0], [1], [0, 0, 1, 1], [], []>} : vector<16x16xf32>, vector<16x256xf32>, vector<16x256xf32> -> vector<16x256xf32>
    %c0_8 = arith.constant 0 : index
    %c0_9 = arith.constant 0 : index
    %28 = vector.load %arg3[%c0_8, %c0_9] : memref<1x256xf32, #tpu.memory_space<vmem>>, vector<1x256xf32>
    %29 = vector.broadcast %28 : vector<1x256xf32> to vector<16x256xf32>
    %30 = arith.addf %27, %29 : vector<16x256xf32>
    %cst_10 = arith.constant 0.000000e+00 : f32
    %31 = vector.broadcast %cst_10 : f32 to vector<16x256xf32>
    %32 = arith.maximumf %30, %31 : vector<16x256xf32>
    %c0_11 = arith.constant 0 : index
    %c0_12 = arith.constant 0 : index
    %33 = vector.load %arg4[%c0_11, %c0_12] : memref<256x256xf32, #tpu.memory_space<vmem>>, vector<256x256xf32>
    %cst_13 = arith.constant dense<0.000000e+00> : vector<16x256xf32>
    %34 = tpu.matmul %32, %33, %cst_13 {dimension_numbers = #tpu.dot_dimension_numbers<[1], [0], [0], [1], [0, 0, 1, 1], [], []>} : vector<16x256xf32>, vector<256x256xf32>, vector<16x256xf32> -> vector<16x256xf32>
    %c0_14 = arith.constant 0 : index
    %c0_15 = arith.constant 0 : index
    %35 = vector.load %arg5[%c0_14, %c0_15] : memref<1x256xf32, #tpu.memory_space<vmem>>, vector<1x256xf32>
    %36 = vector.broadcast %35 : vector<1x256xf32> to vector<16x256xf32>
    %37 = arith.addf %34, %36 : vector<16x256xf32>
    %cst_16 = arith.constant 0.000000e+00 : f32
    %38 = vector.broadcast %cst_16 : f32 to vector<16x256xf32>
    %39 = arith.maximumf %37, %38 : vector<16x256xf32>
    %c0_17 = arith.constant 0 : index
    %c0_18 = arith.constant 0 : index
    %40 = vector.load %arg6[%c0_17, %c0_18] : memref<256x4xf32, #tpu.memory_space<vmem>>, vector<256x4xf32>
    %cst_19 = arith.constant dense<0.000000e+00> : vector<16x4xf32>
    %41 = tpu.matmul %39, %40, %cst_19 {dimension_numbers = #tpu.dot_dimension_numbers<[1], [0], [0], [1], [0, 0, 1, 1], [], []>} : vector<16x256xf32>, vector<256x4xf32>, vector<16x4xf32> -> vector<16x4xf32>
    %c0_20 = arith.constant 0 : index
    %c0_21 = arith.constant 0 : index
    %42 = vector.load %arg7[%c0_20, %c0_21] : memref<1x4xf32, #tpu.memory_space<vmem>>, vector<1x4xf32>
    %43 = vector.broadcast %42 : vector<1x4xf32> to vector<16x4xf32>
    %44 = arith.addf %41, %43 : vector<16x4xf32>
    %c0_22 = arith.constant 0 : index
    %c0_23 = arith.constant 0 : index
    %45 = vector.load %arg8[%c0_22, %c0_23] : memref<16x4xf32, #tpu.memory_space<vmem>>, vector<16x4xf32>
    tpu.vector_store %arg8[%c0_22, %c0_23], %44 {strides = array<i32>} : memref<16x4xf32, #tpu.memory_space<vmem>>, vector<16x4xf32>,
    return
  }
}

</mosaic_0001>

<llo_original>
// kernel: tpu_custom_call.1
$region0: #{tpu_custom_call.1}
  #allocation0 [shape = 'u32[]', space=smem, size = 0x4, offset = 0x4, fixed_abs, tag = 'smem constant byte address 0x4 - core index']
  #allocation1 [shape = 'u32[72,128]{1,0:T(1,128)}', space=vmem, size = 0x9000, scoped, tag = 'internal scratch']
  %s0 = inlined_call_operand.vmem [shape: f32[16,16], index: 0, kind: input, shape index: {}]
  %s1 = inlined_call_operand.vmem [shape: s32[16,2], index: 1, kind: input, shape index: {}]
  %s2 = inlined_call_operand.vmem [shape: f32[16,256], index: 2, kind: input, shape index: {}]
  %s3 = inlined_call_operand.vmem [shape: f32[1,256], index: 3, kind: input, shape index: {}]
  %s4 = inlined_call_operand.hbm [shape: f32[256,256], index: 4, kind: input, shape index: {}]
  %s5 = inlined_call_operand.vmem [shape: f32[1,256], index: 5, kind: input, shape index: {}]
  %s6 = inlined_call_operand.vmem [shape: f32[256,4], index: 6, kind: input, shape index: {}]
  %s7 = inlined_call_operand.vmem [shape: f32[1,4], index: 7, kind: input, shape index: {}]
  %s8 = inlined_call_operand.vmem [shape: f32[16,4], index: 8, kind: output, shape index: {}]
  %s9 = sld [smem:[#allocation0]]
  $region46: #{tpu_custom_call.1} parent=0
    _
  %s11 = ssub.s32 1, %s9
  %s12 = scalar_select 0, %s11, %s9
  $region1: #{tpu_custom_call.1} parent=0
    #allocation2 [shape = 'u8[262144]{0}', space=vmem, size = 0x40000, scoped, tag = 'input window, operand 4, single buffered']
    #allocation3 [shape = 's32[1]{0}', space=sflag, size = 0x4, scoped, tag = 'scoped memory for tpu_custom_call.1']
    %13 = vsyncpa [#allocation3], 0
    // Predicated region
    $region2: #{tpu_custom_call.1} parent=1 // pred_check
      _
    $region3: #{tpu_custom_call.1} parent=1 // pred_check_branch
      %15 = sbr.rel (0) target = $region5
    $region4: #{tpu_custom_call.1} parent=1 // pred_region
      _
    $region5: #{tpu_custom_call.1} parent=1 // pred_fallthru
      _
    // Predicated region
    $region6: #{tpu_custom_call.1} parent=1 // pred_check
      _
    $region7: #{tpu_custom_call.1} parent=1 // pred_check_branch
      %17 = sbr.rel (0) target = $region9
    $region8: #{tpu_custom_call.1} parent=1 // pred_region
      _
    $region9: #{tpu_custom_call.1} parent=1 // pred_fallthru
      _
    // Predicated region
    $region10: #{tpu_custom_call.1} parent=1 // pred_check
      _
    $region11: #{tpu_custom_call.1} parent=1 // pred_check_branch
      %19 = sbr.rel (0) target = $region13
    $region12: #{tpu_custom_call.1} parent=1 // pred_region
      _
    $region13: #{tpu_custom_call.1} parent=1 // pred_fallthru
      _
    // Predicated region
    $region14: #{tpu_custom_call.1} parent=1 // pred_check
      _
    $region15: #{tpu_custom_call.1} parent=1 // pred_check_branch
      %21 = sbr.rel (0) target = $region17
    $region16: #{tpu_custom_call.1} parent=1 // pred_region
      _
    $region17: #{tpu_custom_call.1} parent=1 // pred_fallthru
      _
    // Predicated region
    $region18: #{tpu_custom_call.1} parent=1 // pred_check
      _
    $region19: #{tpu_custom_call.1} parent=1 // pred_check_branch
      %23 = sbr.rel (0) target = $region21
    $region20: #{tpu_custom_call.1} parent=1 // pred_region
      %25 = vsyncadd [#allocation3], 0
      %s26 = sshll.u32 %s4, 4
      %s27 = int_to_ptr.hbm [resolvable:$true] %s26
      %s28 = sshll.u32 [#allocation2], 4
      %s29 = int_to_ptr.vmem [resolvable:$true] %s28
      %34 = dma.hbm_to_vmem [thread:$0]  %s27, 8192, %s29, [#allocation3], 256, 256, 16
    $region21: #{tpu_custom_call.1} parent=1 // pred_fallthru
      _
    // Predicated region
    $region22: #{tpu_custom_call.1} parent=1 // pred_check
      _
    $region23: #{tpu_custom_call.1} parent=1 // pred_check_branch
      %36 = sbr.rel (0) target = $region25
    $region24: #{tpu_custom_call.1} parent=1 // pred_region
      _
    $region25: #{tpu_custom_call.1} parent=1 // pred_fallthru
      _
    // Predicated region
    $region26: #{tpu_custom_call.1} parent=1 // pred_check
      _
    $region27: #{tpu_custom_call.1} parent=1 // pred_check_branch
      %38 = sbr.rel (0) target = $region29
    $region28: #{tpu_custom_call.1} parent=1 // pred_region
      _
    $region29: #{tpu_custom_call.1} parent=1 // pred_fallthru
      _
    // Predicated region
    $region30: #{tpu_custom_call.1} parent=1 // pred_check
      _
    $region31: #{tpu_custom_call.1} parent=1 // pred_check_branch
      %40 = sbr.rel (0) target = $region33
    $region32: #{tpu_custom_call.1} parent=1 // pred_region
      _
    $region33: #{tpu_custom_call.1} parent=1 // pred_fallthru
      _
    // Predicated region
    $region34: #{tpu_custom_call.1} parent=1 // pred_check
      _
    $region35: #{tpu_custom_call.1} parent=1 // pred_check_branch
      %42 = sbr.rel (0) target = $region37
    $region36: #{tpu_custom_call.1} parent=1 // pred_region
      %44 = dma.done [#allocation3], 8192
    $region37: #{tpu_custom_call.1} parent=1 // pred_fallthru
      _
    %v45 = vlaneseq
    %v46 = vand.u32 %v45, 127
    %v47 = vld [vmem:[%s1] sm:$0xff]
    %v48 = vld [vmem:[%s1 + $0x8] sm:$0xff]
    %vm49 = vcmp.ge.s32.totalorder %v46, 8
    %vm50 = vcmp.lt.s32.totalorder %v46, 11
    %vm51 = vmand %vm49, %vm50
    %vm52 = vcmp.ge.s32.totalorder %v46, 11
    %v53 = vsub.s32 %v46, 8
    %54 = vset.pattern.permute.xlu0 0
    %55 = vperm.xlu0 %54, %v47
    %v56 = vpop.permute.xlu0 %55
    %57 = vset.pattern.permute.xlu0 0
    %58 = vperm.xlu0 %57, %v48
    %v59 = vpop.permute.xlu0 %58
    %vm60 = vcmp.eq.s32.totalorder %v56, %v53
    %vm61 = vcmp.eq.s32.totalorder %v59, %v53
    %vm62 = vmand %vm51, %vm60
    %vm63 = vmand %vm51, %vm61
    %v64 = vsub.s32 %v46, 11
    %65 = vset.pattern.permute.xlu0 1
    %66 = vperm.xlu0 %65, %v47
    %v67 = vpop.permute.xlu0 %66
    %68 = vset.pattern.permute.xlu0 1
    %69 = vperm.xlu0 %68, %v48
    %v70 = vpop.permute.xlu0 %69
    %vm71 = vcmp.eq.s32.totalorder %v67, %v64
    %vm72 = vcmp.eq.s32.totalorder %v70, %v64
    %vm73 = vmand %vm52, %vm71
    %vm74 = vmand %vm52, %vm72
    %vm75 = vmor %vm62, %vm73
    %vm76 = vmor %vm63, %vm74
    %v77 = vld [vmem:[%s0] sm:$0xff]
    %v78 = vld [vmem:[%s0 + $0x8] sm:$0xff]
    %v79 = vsel %vm75, 1, 0
    %v80 = vsel %vm76, 1, 0
    %v81 = vcvt.s32.f32 %v79
    %v82 = vcvt.s32.f32 %v80
    %v83 = vadd.f32 %v77, %v81
    %v84 = vadd.f32 %v78, %v82
    %v85 = vld [vmem:[%s2] sm:$0xff]
    %v86 = vld [vmem:[%s2 + $0x8] sm:$0xff]
    %v87 = vld [vmem:[%s2 + $0x10] sm:$0xff]
    %v88 = vld [vmem:[%s2 + $0x18] sm:$0xff]
    %v89 = vld [vmem:[%s3] sm:$0x3]
    %v91 = vperm.slane %v89, 0
    %v92 = vperm.slane %v89, 1
    %vm95 = vcmask 130048
    %v97 = vsel %vm95, %v83, 0
    %v100 = vsel %vm95, %v84, 0
    %102 = vmatpush.msra.mxu0 0.0
    %103 = vmatpush.msra.mxu0 0.0
    %104 = vmatpush.msra.mxu0 0.0
    %105 = vmatpush.msra.mxu0 0.0
    %106 = vmatpush.msra.mxu0 0.0
    %107 = vmatpush.msra.mxu0 0.0
    %108 = vmatpush.msra.mxu0 0.0
    %109 = vmatpush.msra.mxu0 0.0
    %110 = vmatpush.msra.mxu0 0.0
    %111 = vmatpush.msra.mxu0 0.0
    %112 = vmatpush.msra.mxu0 0.0
    %113 = vmatpush.msra.mxu0 0.0
    %114 = vmatpush.msra.mxu0 0.0
    %115 = vmatpush.msra.mxu0 0.0
    %116 = vmatpush.msra.mxu0 %v87
    %117 = vmatpush.msra.mxu0 %v85
    %118 = vmatmul.f32.gmra.mxu0 %v97
    %v119 = vpop.f32.mrf.mxu0
    %v120 = vadd.f32 %v91, %v119
    %121 = vmatmul.f32.gmra.mxu0 %v100
    %v122 = vpop.f32.mrf.mxu0
    %v123 = vadd.f32 %v91, %v122
    %124 = vdwg.mxu0
    %125 = vmatpush.msra.mxu0 0.0
    %126 = vmatpush.msra.mxu0 0.0
    %127 = vmatpush.msra.mxu0 0.0
    %128 = vmatpush.msra.mxu0 0.0
    %129 = vmatpush.msra.mxu0 0.0
    %130 = vmatpush.msra.mxu0 0.0
    %131 = vmatpush.msra.mxu0 0.0
    %132 = vmatpush.msra.mxu0 0.0
    %133 = vmatpush.msra.mxu0 0.0
    %134 = vmatpush.msra.mxu0 0.0
    %135 = vmatpush.msra.mxu0 0.0
    %136 = vmatpush.msra.mxu0 0.0
    %137 = vmatpush.msra.mxu0 0.0
    %138 = vmatpush.msra.mxu0 0.0
    %139 = vmatpush.msra.mxu0 %v88
    %140 = vmatpush.msra.mxu0 %v86
    %141 = vmatmul.f32.gmra.mxu0 %v97
    %v142 = vpop.f32.mrf.mxu0
    %v143 = vadd.f32 %v92, %v142
    %144 = vmatmul.f32.gmra.mxu0 %v100
    %v145 = vpop.f32.mrf.mxu0
    %v146 = vadd.f32 %v92, %v145
    %147 = vdwg.mxu0
    %v148 = vmax.f32 %v120, 0.0
    %v149 = vmax.f32 %v143, 0.0
    %v150 = vmax.f32 %v123, 0.0
    %v151 = vmax.f32 %v146, 0.0
    %v152 = vld [vmem:[#allocation2] sm:$0xff]
    %v153 = vld [vmem:[#allocation2 + $0x8] sm:$0xff]
    %v154 = vld [vmem:[#allocation2 + $0x10] sm:$0xff]
    %v155 = vld [vmem:[#allocation2 + $0x18] sm:$0xff]
    %v156 = vld [vmem:[#allocation2 + $0x20] sm:$0xff]
    %v157 = vld [vmem:[#allocation2 + $0x28] sm:$0xff]
    %v158 = vld [vmem:[#allocation2 + $0x30] sm:$0xff]
    %v159 = vld [vmem:[#allocation2 + $0x38] sm:$0xff]
    %v160 = vld [vmem:[#allocation2 + $0x40] sm:$0xff]
    %v161 = vld [vmem:[#allocation2 + $0x48] sm:$0xff]
    %v162 = vld [vmem:[#allocation2 + $0x50] sm:$0xff]
    %v163 = vld [vmem:[#allocation2 + $0x58] sm:$0xff]
    %v164 = vld [vmem:[#allocation2 + $0x60] sm:$0xff]
    %v165 = vld [vmem:[#allocation2 + $0x68] sm:$0xff]
    %v166 = vld [vmem:[#allocation2 + $0x70] sm:$0xff]
    %v167 = vld [vmem:[#allocation2 + $0x78] sm:$0xff]
    %v168 = vld [vmem:[#allocation2 + $0x80] sm:$0xff]
    %v169 = vld [vmem:[#allocation2 + $0x88] sm:$0xff]
    %v170 = vld [vmem:[#allocation2 + $0x90] sm:$0xff]
    %v171 = vld [vmem:[#allocation2 + $0x98] sm:$0xff]
    %v172 = vld [vmem:[#allocation2 + $0xa0] sm:$0xff]
    %v173 = vld [vmem:[#allocation2 + $0xa8] sm:$0xff]
    %v174 = vld [vmem:[#allocation2 + $0xb0] sm:$0xff]
    %v175 = vld [vmem:[#allocation2 + $0xb8] sm:$0xff]
    %v176 = vld [vmem:[#allocation2 + $0xc0] sm:$0xff]
    %v177 = vld [vmem:[#allocation2 + $0xc8] sm:$0xff]
    %v178 = vld [vmem:[#allocation2 + $0xd0] sm:$0xff]
    %v179 = vld [vmem:[#allocation2 + $0xd8] sm:$0xff]
    %v180 = vld [vmem:[#allocation2 + $0xe0] sm:$0xff]
    %v181 = vld [vmem:[#allocation2 + $0xe8] sm:$0xff]
    %v182 = vld [vmem:[#allocation2 + $0xf0] sm:$0xff]
    %v183 = vld [vmem:[#allocation2 + $0xf8] sm:$0xff]
    %v184 = vld [vmem:[#allocation2 + $0x100] sm:$0xff]
    %v185 = vld [vmem:[#allocation2 + $0x108] sm:$0xff]
    %v186 = vld [vmem:[#allocation2 + $0x110] sm:$0xff]
    %v187 = vld [vmem:[#allocation2 + $0x118] sm:$0xff]
    %v188 = vld [vmem:[#allocation2 + $0x120] sm:$0xff]
    %v189 = vld [vmem:[#allocation2 + $0x128] sm:$0xff]
    %v190 = vld [vmem:[#allocation2 + $0x130] sm:$0xff]
    %v191 = vld [vmem:[#allocation2 + $0x138] sm:$0xff]
    %v192 = vld [vmem:[#allocation2 + $0x140] sm:$0xff]
    %v193 = vld [vmem:[#allocation2 + $0x148] sm:$0xff]
    %v194 = vld [vmem:[#allocation2 + $0x150] sm:$0xff]
    %v195 = vld [vmem:[#allocation2 + $0x158] sm:$0xff]
    %v196 = vld [vmem:[#allocation2 + $0x160] sm:$0xff]
    %v197 = vld [vmem:[#allocation2 + $0x168] sm:$0xff]
    %v198 = vld [vmem:[#allocation2 + $0x170] sm:$0xff]
    %v199 = vld [vmem:[#allocation2 + $0x178] sm:$0xff]
    %v200 = vld [vmem:[#allocation2 + $0x180] sm:$0xff]
    %v201 = vld [vmem:[#allocation2 + $0x188] sm:$0xff]
    %v202 = vld [vmem:[#allocation2 + $0x190] sm:$0xff]
    %v203 = vld [vmem:[#allocation2 + $0x198] sm:$0xff]
    %v204 = vld [vmem:[#allocation2 + $0x1a0] sm:$0xff]
    %v205 = vld [vmem:[#allocation2 + $0x1a8] sm:$0xff]
    %v206 = vld [vmem:[#allocation2 + $0x1b0] sm:$0xff]
    %v207 = vld [vmem:[#allocation2 + $0x1b8] sm:$0xff]
    %v208 = vld [vmem:[#allocation2 + $0x1c0] sm:$0xff]
    %v209 = vld [vmem:[#allocation2 + $0x1c8] sm:$0xff]
    %v210 = vld [vmem:[#allocation2 + $0x1d0] sm:$0xff]
    %v211 = vld [vmem:[#allocation2 + $0x1d8] sm:$0xff]
    %v212 = vld [vmem:[#allocation2 + $0x1e0] sm:$0xff]
    %v213 = vld [vmem:[#allocation2 + $0x1e8] sm:$0xff]
    %v214 = vld [vmem:[#allocation2 + $0x1f0] sm:$0xff]
    %v215 = vld [vmem:[#allocation2 + $0x1f8] sm:$0xff]
    %v216 = vld [vmem:[%s5] sm:$0x3]
    %v218 = vperm.slane %v216, 0
    %v219 = vperm.slane %v216, 1
    %222 = vmatpush.msra.mxu0 %v182
    %223 = vmatpush.msra.mxu0 %v180
    %224 = vmatpush.msra.mxu0 %v178
    %225 = vmatpush.msra.mxu0 %v176
    %226 = vmatpush.msra.mxu0 %v174
    %227 = vmatpush.msra.mxu0 %v172
    %228 = vmatpush.msra.mxu0 %v170
    %229 = vmatpush.msra.mxu0 %v168
    %230 = vmatpush.msra.mxu0 %v166
    %231 = vmatpush.msra.mxu0 %v164
    %232 = vmatpush.msra.mxu0 %v162
    %233 = vmatpush.msra.mxu0 %v160
    %234 = vmatpush.msra.mxu0 %v158
    %235 = vmatpush.msra.mxu0 %v156
    %236 = vmatpush.msra.mxu0 %v154
    %237 = vmatpush.msra.mxu0 %v152
    %238 = vmatmul.f32.gmra.mxu0 %v148
    %v239 = vpop.f32.mrf.mxu0
    %v240 = vadd.f32 %v218, %v239
    %241 = vmatmul.f32.gmra.mxu0 %v150
    %v242 = vpop.f32.mrf.mxu0
    %v243 = vadd.f32 %v218, %v242
    %244 = vdwg.mxu0
    %245 = vmatpush.msra.mxu0 %v214
    %246 = vmatpush.msra.mxu0 %v212
    %247 = vmatpush.msra.mxu0 %v210
    %248 = vmatpush.msra.mxu0 %v208
    %249 = vmatpush.msra.mxu0 %v206
    %250 = vmatpush.msra.mxu0 %v204
    %251 = vmatpush.msra.mxu0 %v202
    %252 = vmatpush.msra.mxu0 %v200
    %253 = vmatpush.msra.mxu0 %v198
    %254 = vmatpush.msra.mxu0 %v196
    %255 = vmatpush.msra.mxu0 %v194
    %256 = vmatpush.msra.mxu0 %v192
    %257 = vmatpush.msra.mxu0 %v190
    %258 = vmatpush.msra.mxu0 %v188
    %259 = vmatpush.msra.mxu0 %v186
    %260 = vmatpush.msra.mxu0 %v184
    %261 = vmatmul.f32.gmra.mxu0 %v149
    %v262 = vpop.f32.mrf.mxu0
    %v263 = vadd.f32 %v240, %v262
    %264 = vmatmul.f32.gmra.mxu0 %v151
    %v265 = vpop.f32.mrf.mxu0
    %v266 = vadd.f32 %v243, %v265
    %267 = vdwg.mxu0
    %268 = vmatpush.msra.mxu0 %v183
    %269 = vmatpush.msra.mxu0 %v181
    %270 = vmatpush.msra.mxu0 %v179
    %271 = vmatpush.msra.mxu0 %v177
    %272 = vmatpush.msra.mxu0 %v175
    %273 = vmatpush.msra.mxu0 %v173
    %274 = vmatpush.msra.mxu0 %v171
    %275 = vmatpush.msra.mxu0 %v169
    %276 = vmatpush.msra.mxu0 %v167
    %277 = vmatpush.msra.mxu0 %v165
    %278 = vmatpush.msra.mxu0 %v163
    %279 = vmatpush.msra.mxu0 %v161
    %280 = vmatpush.msra.mxu0 %v159
    %281 = vmatpush.msra.mxu0 %v157
    %282 = vmatpush.msra.mxu0 %v155
    %283 = vmatpush.msra.mxu0 %v153
    %284 = vmatmul.f32.gmra.mxu0 %v148
    %v285 = vpop.f32.mrf.mxu0
    %v286 = vadd.f32 %v219, %v285
    %287 = vmatmul.f32.gmra.mxu0 %v150
    %v288 = vpop.f32.mrf.mxu0
    %v289 = vadd.f32 %v219, %v288
    %290 = vdwg.mxu0
    %291 = vmatpush.msra.mxu0 %v215
    %292 = vmatpush.msra.mxu0 %v213
    %293 = vmatpush.msra.mxu0 %v211
    %294 = vmatpush.msra.mxu0 %v209
    %295 = vmatpush.msra.mxu0 %v207
    %296 = vmatpush.msra.mxu0 %v205
    %297 = vmatpush.msra.mxu0 %v203
    %298 = vmatpush.msra.mxu0 %v201
    %299 = vmatpush.msra.mxu0 %v199
    %300 = vmatpush.msra.mxu0 %v197
    %301 = vmatpush.msra.mxu0 %v195
    %302 = vmatpush.msra.mxu0 %v193
    %303 = vmatpush.msra.mxu0 %v191
    %304 = vmatpush.msra.mxu0 %v189
    %305 = vmatpush.msra.mxu0 %v187
    %306 = vmatpush.msra.mxu0 %v185
    %307 = vmatmul.f32.gmra.mxu0 %v149
    %v308 = vpop.f32.mrf.mxu0
    %v309 = vadd.f32 %v286, %v308
    %310 = vmatmul.f32.gmra.mxu0 %v151
    %v311 = vpop.f32.mrf.mxu0
    %v312 = vadd.f32 %v289, %v311
    %313 = vdwg.mxu0
    %v314 = vmax.f32 %v263, 0.0
    %v315 = vmax.f32 %v309, 0.0
    %v316 = vmax.f32 %v266, 0.0
    %v317 = vmax.f32 %v312, 0.0
    %v318 = vld [vmem:[%s6] sm:$0xff]
    %v319 = vld [vmem:[%s6 + $0x8] sm:$0xff]
    %v320 = vld [vmem:[%s6 + $0x10] sm:$0xff]
    %v321 = vld [vmem:[%s6 + $0x18] sm:$0xff]
    %v322 = vld [vmem:[%s6 + $0x20] sm:$0xff]
    %v323 = vld [vmem:[%s6 + $0x28] sm:$0xff]
    %v324 = vld [vmem:[%s6 + $0x30] sm:$0xff]
    %v325 = vld [vmem:[%s6 + $0x38] sm:$0xff]
    %v326 = vld [vmem:[%s6 + $0x40] sm:$0xff]
    %v327 = vld [vmem:[%s6 + $0x48] sm:$0xff]
    %v328 = vld [vmem:[%s6 + $0x50] sm:$0xff]
    %v329 = vld [vmem:[%s6 + $0x58] sm:$0xff]
    %v330 = vld [vmem:[%s6 + $0x60] sm:$0xff]
    %v331 = vld [vmem:[%s6 + $0x68] sm:$0xff]
    %v332 = vld [vmem:[%s6 + $0x70] sm:$0xff]
    %v333 = vld [vmem:[%s6 + $0x78] sm:$0xff]
    %v334 = vld [vmem:[%s6 + $0x80] sm:$0xff]
    %v335 = vld [vmem:[%s6 + $0x88] sm:$0xff]
    %v336 = vld [vmem:[%s6 + $0x90] sm:$0xff]
    %v337 = vld [vmem:[%s6 + $0x98] sm:$0xff]
    %v338 = vld [vmem:[%s6 + $0xa0] sm:$0xff]
    %v339 = vld [vmem:[%s6 + $0xa8] sm:$0xff]
    %v340 = vld [vmem:[%s6 + $0xb0] sm:$0xff]
    %v341 = vld [vmem:[%s6 + $0xb8] sm:$0xff]
    %v342 = vld [vmem:[%s6 + $0xc0] sm:$0xff]
    %v343 = vld [vmem:[%s6 + $0xc8] sm:$0xff]
    %v344 = vld [vmem:[%s6 + $0xd0] sm:$0xff]
    %v345 = vld [vmem:[%s6 + $0xd8] sm:$0xff]
    %v346 = vld [vmem:[%s6 + $0xe0] sm:$0xff]
    %v347 = vld [vmem:[%s6 + $0xe8] sm:$0xff]
    %v348 = vld [vmem:[%s6 + $0xf0] sm:$0xff]
    %v349 = vld [vmem:[%s6 + $0xf8] sm:$0xff]
    %v350 = vld [vmem:[%s7] sm:$0x1]
    %v352 = vperm.slane %v350, 0
    %354 = vmatpush.msra.mxu0 %v333
    %355 = vmatpush.msra.mxu0 %v332
    %356 = vmatpush.msra.mxu0 %v331
    %357 = vmatpush.msra.mxu0 %v330
    %358 = vmatpush.msra.mxu0 %v329
    %359 = vmatpush.msra.mxu0 %v328
    %360 = vmatpush.msra.mxu0 %v327
    %361 = vmatpush.msra.mxu0 %v326
    %362 = vmatpush.msra.mxu0 %v325
    %363 = vmatpush.msra.mxu0 %v324
    %364 = vmatpush.msra.mxu0 %v323
    %365 = vmatpush.msra.mxu0 %v322
    %366 = vmatpush.msra.mxu0 %v321
    %367 = vmatpush.msra.mxu0 %v320
    %368 = vmatpush.msra.mxu0 %v319
    %369 = vmatpush.msra.mxu0 %v318
    %370 = vmatmul.f32.gmra.mxu0 %v314
    %v371 = vpop.f32.mrf.mxu0
    %v372 = vadd.f32 %v352, %v371
    %373 = vmatmul.f32.gmra.mxu0 %v316
    %v374 = vpop.f32.mrf.mxu0
    %v375 = vadd.f32 %v352, %v374
    %376 = vdwg.mxu0
    %377 = vmatpush.msra.mxu0 %v349
    %378 = vmatpush.msra.mxu0 %v348
    %379 = vmatpush.msra.mxu0 %v347
    %380 = vmatpush.msra.mxu0 %v346
    %381 = vmatpush.msra.mxu0 %v345
    %382 = vmatpush.msra.mxu0 %v344
    %383 = vmatpush.msra.mxu0 %v343
    %384 = vmatpush.msra.mxu0 %v342
    %385 = vmatpush.msra.mxu0 %v341
    %386 = vmatpush.msra.mxu0 %v340
    %387 = vmatpush.msra.mxu0 %v339
    %388 = vmatpush.msra.mxu0 %v338
    %389 = vmatpush.msra.mxu0 %v337
    %390 = vmatpush.msra.mxu0 %v336
    %391 = vmatpush.msra.mxu0 %v335
    %392 = vmatpush.msra.mxu0 %v334
    %393 = vmatmul.f32.gmra.mxu0 %v315
    %v394 = vpop.f32.mrf.mxu0
    %v395 = vadd.f32 %v372, %v394
    %396 = vmatmul.f32.gmra.mxu0 %v317
    %v397 = vpop.f32.mrf.mxu0
    %v398 = vadd.f32 %v375, %v397
    %399 = vdwg.mxu0
    %vm400 = vcmask 31744
    %401 = vst.msk [vmem:[%s8] sm:$0xff] %vm400, %v395
    %402 = vst.msk [vmem:[%s8 + $0x8] sm:$0xff] %vm400, %v398
    // Predicated region
    $region38: #{tpu_custom_call.1} parent=1 // pred_check
      _
    $region39: #{tpu_custom_call.1} parent=1 // pred_check_branch
      %404 = sbr.rel (0) target = $region41
    $region40: #{tpu_custom_call.1} parent=1 // pred_region
      _
    $region41: #{tpu_custom_call.1} parent=1 // pred_fallthru
      _
    // Predicated region
    $region42: #{tpu_custom_call.1} parent=1 // pred_check
      _
    $region43: #{tpu_custom_call.1} parent=1 // pred_check_branch
      %406 = sbr.rel (0) target = $region45
    $region44: #{tpu_custom_call.1} parent=1 // pred_region
      _
    $region45: #{tpu_custom_call.1} parent=1 // pred_fallthru
      _
    %407 = vsyncpa [#allocation3], 1

</llo_original>
